<compile_context>
chip_gen: v7x
topology: tpu7x:2x2x1
jax: 0.10.0
libtpu: 0.0.40
codegen_flags: <defaults>
</compile_context>

<pallas_src>
import functools

import jax
import jax.numpy as jnp
from jax.experimental import pallas as pl
from jax.experimental.pallas import tpu as pltpu


def _round_up(x, m):
    return ((x + m - 1) // m) * m


def _vmem_capacity_bytes():
    """Per-core VMEM capacity; conservative fallback if the query is unavailable.

    (Probe-time only -- this try/except never wraps the real kernel call.)
    """
    try:
        cap = int(pltpu.get_tpu_info().vmem_capacity_bytes)
        if cap > 0:
            return cap
    except Exception:
        pass
    return 64 * 1024 * 1024  # v7x per-TensorCore VMEM (smallest of v5e/v6e/v7x)


def _footprint_bytes(tm, c, x_itemsize, w_itemsize, out_itemsize):
    """Worst-case resident VMEM for one pipelined grid step."""
    xio = 2 * tm * c * (x_itemsize + out_itemsize)  # double-buffered x tile + out tile
    wts = 2 * 2 * c * c * w_itemsize                # two resident weights (2x buffers worst case)
    mid = tm * c * (4 + 4 + w_itemsize)             # f32 acc, f32 result, compute-dtype h
    return xio + wts + mid


def _select_tile_rows(n, c, x_itemsize, w_itemsize, out_itemsize, sublane,
                      vmem_budget, tm_cap=1024):
    """Largest row tile that fits the VMEM budget (multiple of the sublane
    granularity, capped at tm_cap).  No forced multi-step split for small bags:
    on v5e/v6e (one TensorCore) that is pure overhead."""
    tm = _round_up(min(max(n, sublane), tm_cap), sublane)
    while (tm > sublane and
           _footprint_bytes(tm, c, x_itemsize, w_itemsize, out_itemsize) > vmem_budget):
        tm = max(sublane, _round_up(tm // 2, sublane))
    return tm


def _residual_block_kernel(x_ref, w1_ref, w2_ref, o_ref, *, compute_dtype):
    # x_ref : (tm, C) row tile (original dtype; kept exact for the residual add)
    # w1_ref: (C, C)  W1.T in (C_in, C_out) layout, compute dtype
    # w2_ref: (C, C)  W2.T in (C_in, C_out) layout, compute dtype
    x = x_ref[...]
    h = jnp.dot(x.astype(compute_dtype), w1_ref[...],
                preferred_element_type=jnp.float32)
    h = jnp.maximum(h, 0.0).astype(compute_dtype)        # fused ReLU + downcast
    t = jnp.dot(h, w2_ref[...], preferred_element_type=jnp.float32)
    t = jnp.maximum(t, 0.0)                              # ReLU
    o_ref[...] = (x.astype(jnp.float32) + t).astype(o_ref.dtype)


@functools.lru_cache(maxsize=None)
def _build_call(n, c, tm, io_dtype_name, compute_dtype_name, vmem_limit):
    io_dtype = jnp.dtype(io_dtype_name)
    compute_dtype = jnp.dtype(compute_dtype_name)
    kernel = functools.partial(_residual_block_kernel, compute_dtype=compute_dtype)
    flops = 4 * n * c * c                                            # two GEMMs
    bytes_accessed = (n * c * 2 * io_dtype.itemsize                  # x in + out
                      + 2 * c * c * compute_dtype.itemsize)          # resident weights
    return pl.pallas_call(
        kernel,
        out_shape=jax.ShapeDtypeStruct((n, c), io_dtype),
        grid_spec=pltpu.PrefetchScalarGridSpec(
            num_scalar_prefetch=0,
            grid=(pl.cdiv(n, tm),),
            in_specs=[
                pl.BlockSpec((tm, c), lambda i: (i, 0)),   # x row tile
                pl.BlockSpec((c, c), lambda i: (0, 0)),    # W1.T, resident (index never changes)
                pl.BlockSpec((c, c), lambda i: (0, 0)),    # W2.T, resident
            ],
            out_specs=pl.BlockSpec((tm, c), lambda i: (i, 0)),
        ),
        compiler_params=pltpu.CompilerParams(
            dimension_semantics=("parallel",),
            vmem_limit_bytes=vmem_limit,
        ),
        cost_estimate=pl.CostEstimate(
            flops=flops, transcendentals=0, bytes_accessed=bytes_accessed),
    )


def residual_block(x, w1, w2, *, compute_dtype=jnp.bfloat16, tm=None):
    """DTFD residual_block: x + ReLU(ReLU(x @ w1.T) @ w2.T).

    x : (N, C) instance features (f32 or bf16).
    w1, w2 : (C, C) in PyTorch nn.Linear (out, in) layout.
    compute_dtype : dtype fed to the MXU (bf16 default; accumulation and the
        residual add stay float32).  Pass jnp.float32 for the exact f32 path.
    """
    N, C = x.shape
    assert w1.shape == (C, C) and w2.shape == (C, C)
    compute_dtype = jnp.dtype(compute_dtype)
    io_dtype = jnp.dtype(x.dtype)

    x_itemsize = io_dtype.itemsize
    out_itemsize = x_itemsize
    w_itemsize = compute_dtype.itemsize
    # Min sublane granularity of the row tile: 8 (32-bit), 16 (16-bit), 32 (8-bit).
    sublane = 8 if x_itemsize >= 4 else (16 if x_itemsize == 2 else 32)

    vmem_cap = _vmem_capacity_bytes()
    vmem_budget = (vmem_cap * 3) // 4  # tiling budget with headroom for Mosaic scratch
    if tm is None:
        tm = _select_tile_rows(N, C, x_itemsize, w_itemsize, out_itemsize,
                               sublane, vmem_budget)
    tm = max(sublane, _round_up(tm, sublane))

    footprint = _footprint_bytes(tm, C, x_itemsize, w_itemsize, out_itemsize)
    vmem_limit = int(min(max(footprint * 5 // 4, 32 * 1024 * 1024),
                         (vmem_cap * 17) // 20))  # <= ~85% of per-core VMEM

    # One-time host-side weight prep: transpose to (C_in, C_out) so the kernel
    # does the canonical x @ W contraction (no in-kernel transpose), and cast
    # to the MXU compute dtype (halves weight DMA bytes for bf16).
    w1t = jnp.asarray(w1).T.astype(compute_dtype)
    w2t = jnp.asarray(w2).T.astype(compute_dtype)

    call = _build_call(N, C, tm, str(io_dtype), str(compute_dtype), vmem_limit)
    return call(x, w1t, w2t)


if __name__ == "__main__":
    key = jax.random.PRNGKey(0)
    k_x, k_x2, k_w1, k_w2 = jax.random.split(key, 4)

    C = 128  # module default nChn=512, scaled down for the smoke test
    bound = float(1.0 / (C ** 0.5))
    w1 = jax.random.uniform(k_w1, (C, C), minval=-bound, maxval=bound,
                            dtype=jnp.float32)
    w2 = jax.random.uniform(k_w2, (C, C), minval=-bound, maxval=bound,
                            dtype=jnp.float32)

    def ref(x):
        return x + jnp.maximum(jnp.maximum(x @ w1.T, 0.0) @ w2.T, 0.0)

    # Case 1: aligned row count, explicit f32 MXU path (tight tolerance).
    x = jax.random.normal(k_x, (16, C), dtype=jnp.float32)
    out = jax.block_until_ready(residual_block(x, w1, w2, compute_dtype=jnp.float32))
    assert out.shape == x.shape
    assert jnp.allclose(out, ref(x), atol=1e-4, rtol=1e-4)

    # Case 2: ragged row count, f32 path (exercises the unpadded masked last block).
    x2 = jax.random.normal(k_x2, (21, C), dtype=jnp.float32)
    out2 = jax.block_until_ready(residual_block(x2, w1, w2, compute_dtype=jnp.float32))
    assert out2.shape == x2.shape
    assert jnp.allclose(out2, ref(x2), atol=1e-4, rtol=1e-4)

    # Case 3: default bf16 MXU path (f32 accumulation + f32 residual add).
    out3 = jax.block_until_ready(residual_block(x, w1, w2))
    assert jnp.allclose(out3, ref(x), atol=5e-2, rtol=5e-2)

    # Case 4: bf16 features end-to-end (bf16 row-tile DMA + bf16 output write).
    x_bf16 = x.astype(jnp.bfloat16)
    out4 = jax.block_until_ready(residual_block(x_bf16, w1, w2))
    assert out4.dtype == jnp.bfloat16
    assert jnp.allclose(out4.astype(jnp.float32), ref(x), atol=1e-1, rtol=1e-1)

    print("KERNEL_OK")
</pallas_src>

<mosaic_0001>
module attributes {stable_mosaic.version = 11 : i64} {
  func.func @_residual_block_kernel(%arg0: i32, %arg1: memref<16x128xf32, #tpu.memory_space<vmem>>, %arg2: memref<128x128xf32, #tpu.memory_space<vmem>>, %arg3: memref<128x128xf32, #tpu.memory_space<vmem>>, %arg4: memref<16x128xf32, #tpu.memory_space<vmem>>) attributes {dimension_semantics = [#tpu.dimension_semantics<parallel>], iteration_bounds = array<i64: 1>, scalar_prefetch = 0 : i64, scratch_operands = 0 : i64, tpu.core_type = #tpu.core_type<tc>, window_params = [{transform_indices = @transform_0, window_bounds = array<i64: 16, 128>}, {pipeline_mode = #tpu.pipeline_mode<synchronous>, transform_indices = @transform_1, window_bounds = array<i64: 128, 128>}, {pipeline_mode = #tpu.pipeline_mode<synchronous>, transform_indices = @transform_2, window_bounds = array<i64: 128, 128>}, {transform_indices = @transform_3, window_bounds = array<i64: 16, 128>}]} {
    %c0 = arith.constant 0 : index
    %c0_0 = arith.constant 0 : index
    %0 = vector.load %arg1[%c0, %c0_0] : memref<16x128xf32, #tpu.memory_space<vmem>>, vector<16x128xf32>
    %c0_1 = arith.constant 0 : index
    %c0_2 = arith.constant 0 : index
    %1 = vector.load %arg2[%c0_1, %c0_2] : memref<128x128xf32, #tpu.memory_space<vmem>>, vector<128x128xf32>
    %cst = arith.constant dense<0.000000e+00> : vector<16x128xf32>
    %2 = tpu.matmul %0, %1, %cst {dimension_numbers = #tpu.dot_dimension_numbers<[1], [0], [0], [1], [0, 0, 1, 1], [], []>} : vector<16x128xf32>, vector<128x128xf32>, vector<16x128xf32> -> vector<16x128xf32>
    %cst_3 = arith.constant 0.000000e+00 : f32
    %3 = vector.broadcast %cst_3 : f32 to vector<16x128xf32>
    %4 = arith.maximumf %2, %3 : vector<16x128xf32>
    %c0_4 = arith.constant 0 : index
    %c0_5 = arith.constant 0 : index
    %5 = vector.load %arg3[%c0_4, %c0_5] : memref<128x128xf32, #tpu.memory_space<vmem>>, vector<128x128xf32>
    %cst_6 = arith.constant dense<0.000000e+00> : vector<16x128xf32>
    %6 = tpu.matmul %4, %5, %cst_6 {dimension_numbers = #tpu.dot_dimension_numbers<[1], [0], [0], [1], [0, 0, 1, 1], [], []>} : vector<16x128xf32>, vector<128x128xf32>, vector<16x128xf32> -> vector<16x128xf32>
    %cst_7 = arith.constant 0.000000e+00 : f32
    %7 = vector.broadcast %cst_7 : f32 to vector<16x128xf32>
    %8 = arith.maximumf %6, %7 : vector<16x128xf32>
    %9 = arith.addf %0, %8 : vector<16x128xf32>
    %c0_8 = arith.constant 0 : index
    %c0_9 = arith.constant 0 : index
    %10 = vector.load %arg4[%c0_8, %c0_9] : memref<16x128xf32, #tpu.memory_space<vmem>>, vector<16x128xf32>
    tpu.vector_store %arg4[%c0_8, %c0_9], %9 {strides = array<i32>} : memref<16x128xf32, #tpu.memory_space<vmem>>, vector<16x128xf32>,
    return
  }
  func.func @transform_0(%arg0: i32) -> (i32, i32) {
    %c0_i32 = arith.constant 0 : i32
    %c0_i32_0 = arith.constant 0 : i32
    return %arg0, %c0_i32 : i32, i32
  }
  func.func @transform_1(%arg0: i32) -> (i32, i32) {
    %c0_i32 = arith.constant 0 : i32
    %c0_i32_0 = arith.constant 0 : i32
    %c0_i32_1 = arith.constant 0 : i32
    return %c0_i32, %c0_i32_0 : i32, i32
  }
  func.func @transform_2(%arg0: i32) -> (i32, i32) {
    %c0_i32 = arith.constant 0 : i32
    %c0_i32_0 = arith.constant 0 : i32
    %c0_i32_1 = arith.constant 0 : i32
    return %c0_i32, %c0_i32_0 : i32, i32
  }
  func.func @transform_3(%arg0: i32) -> (i32, i32) {
    %c0_i32 = arith.constant 0 : i32
    %c0_i32_0 = arith.constant 0 : i32
    return %arg0, %c0_i32 : i32, i32
  }
}

</mosaic_0001>

<llo_original>
// kernel: tpu_custom_call.1
$region0: #{tpu_custom_call.1}
  #allocation0 [shape = 'u32[]', space=smem, size = 0x4, offset = 0x4, fixed_abs, tag = 'smem constant byte address 0x4 - core index']
  #allocation1 [shape = 'u32[144,128]{1,0:T(1,128)}', space=vmem, size = 0x12000, scoped, tag = 'internal scratch']
  %s0 = inlined_call_operand.hbm [shape: f32[16,128], index: 0, kind: input, shape index: {}]
  %s1 = inlined_call_operand.hbm [shape: f32[128,128], index: 1, kind: input, shape index: {}]
  %s2 = inlined_call_operand.hbm [shape: f32[128,128], index: 2, kind: input, shape index: {}]
  %s3 = inlined_call_operand.hbm [shape: f32[16,128], index: 3, kind: output, shape index: {}]
  %s4 = sld [smem:[#allocation0]]
  $region34: #{tpu_custom_call.1} parent=0
    _
  %s6 = ssub.s32 1, %s4
  %s7 = scalar_select 0, %s6, %s4
  $region1: #{tpu_custom_call.1} parent=0
    #allocation2 [shape = 'u8[8192]{0}', space=vmem, size = 0x2000, scoped, tag = 'input window, operand 0, single buffered']
    #allocation3 [shape = 's32[1]{0}', space=sflag, size = 0x4, scoped, tag = 'scoped memory for tpu_custom_call.1']
    #allocation4 [shape = 's32[1]{0}', space=sflag, size = 0x4, scoped, tag = 'scoped memory for tpu_custom_call.1']
    #allocation5 [shape = 'u8[65536]{0}', space=vmem, size = 0x10000, scoped, tag = 'input window, operand 1, single buffered']
    #allocation6 [shape = 's32[1]{0}', space=sflag, size = 0x4, scoped, tag = 'scoped memory for tpu_custom_call.1']
    #allocation7 [shape = 'u8[65536]{0}', space=vmem, size = 0x10000, scoped, tag = 'input window, operand 2, single buffered']
    #allocation8 [shape = 'u8[8192]{0}', space=vmem, size = 0x2000, scoped, tag = 'output window, operand 0, single buffered']
    %8 = vsyncpa [#allocation3], 0
    %9 = vsyncpa [#allocation6], 0
    %10 = vsyncpa [#allocation4], 0
    // Predicated region
    $region2: #{tpu_custom_call.1} parent=1 // pred_check
      _
    $region3: #{tpu_custom_call.1} parent=1 // pred_check_branch
      %12 = sbr.rel (0) target = $region5
    $region4: #{tpu_custom_call.1} parent=1 // pred_region
      %s14 = ssub.s32 256, 256
      %15 = vsyncadd [#allocation3], %s14
      %s16 = sshll.u32 [#allocation2], 4
      %s17 = int_to_ptr.vmem [resolvable:$true] %s16
      %22 = dma.hbm_to_vmem [thread:$0]  %s0, 256, %s17, [#allocation3], 128, 128, 8
    $region5: #{tpu_custom_call.1} parent=1 // pred_fallthru
      _
    // Predicated region
    $region6: #{tpu_custom_call.1} parent=1 // pred_check
      _
    $region7: #{tpu_custom_call.1} parent=1 // pred_check_branch
      %24 = sbr.rel (0) target = $region9
    $region8: #{tpu_custom_call.1} parent=1 // pred_region
      %s26 = ssub.s32 2048, 2048
      %27 = vsyncadd [#allocation6], %s26
      %s28 = sshll.u32 [#allocation5], 4
      %s29 = int_to_ptr.vmem [resolvable:$true] %s28
      %34 = dma.hbm_to_vmem [thread:$0]  %s1, 2048, %s29, [#allocation6], 128, 128, 8
    $region9: #{tpu_custom_call.1} parent=1 // pred_fallthru
      _
    // Predicated region
    $region10: #{tpu_custom_call.1} parent=1 // pred_check
      _
    $region11: #{tpu_custom_call.1} parent=1 // pred_check_branch
      %36 = sbr.rel (0) target = $region13
    $region12: #{tpu_custom_call.1} parent=1 // pred_region
      %s38 = ssub.s32 2048, 2048
      %39 = vsyncadd [#allocation6], %s38
      %s40 = sshll.u32 [#allocation7], 4
      %s41 = int_to_ptr.vmem [resolvable:$true] %s40
      %46 = dma.hbm_to_vmem [thread:$0]  %s2, 2048, %s41, [#allocation6], 128, 128, 8
    $region13: #{tpu_custom_call.1} parent=1 // pred_fallthru
      _
    // Predicated region
    $region14: #{tpu_custom_call.1} parent=1 // pred_check
      _
    $region15: #{tpu_custom_call.1} parent=1 // pred_check_branch
      %48 = sbr.rel (0) target = $region17
    $region16: #{tpu_custom_call.1} parent=1 // pred_region
      %49 = dma.done [#allocation3], 256
    $region17: #{tpu_custom_call.1} parent=1 // pred_fallthru
      _
    // Predicated region
    $region18: #{tpu_custom_call.1} parent=1 // pred_check
      _
    $region19: #{tpu_custom_call.1} parent=1 // pred_check_branch
      %51 = sbr.rel (0) target = $region21
    $region20: #{tpu_custom_call.1} parent=1 // pred_region
      %52 = dma.done [#allocation6], 2048
    $region21: #{tpu_custom_call.1} parent=1 // pred_fallthru
      _
    // Predicated region
    $region22: #{tpu_custom_call.1} parent=1 // pred_check
      _
    $region23: #{tpu_custom_call.1} parent=1 // pred_check_branch
      %54 = sbr.rel (0) target = $region25
    $region24: #{tpu_custom_call.1} parent=1 // pred_region
      %55 = dma.done [#allocation6], 2048
    $region25: #{tpu_custom_call.1} parent=1 // pred_fallthru
      _
    %v56 = vld [vmem:[#allocation2] sm:$0xff]
    %v57 = vld [vmem:[#allocation2 + $0x8] sm:$0xff]
    %v58 = vld [vmem:[#allocation5] sm:$0xff]
    %v59 = vld [vmem:[#allocation5 + $0x8] sm:$0xff]
    %v60 = vld [vmem:[#allocation5 + $0x10] sm:$0xff]
    %v61 = vld [vmem:[#allocation5 + $0x18] sm:$0xff]
    %v62 = vld [vmem:[#allocation5 + $0x20] sm:$0xff]
    %v63 = vld [vmem:[#allocation5 + $0x28] sm:$0xff]
    %v64 = vld [vmem:[#allocation5 + $0x30] sm:$0xff]
    %v65 = vld [vmem:[#allocation5 + $0x38] sm:$0xff]
    %v66 = vld [vmem:[#allocation5 + $0x40] sm:$0xff]
    %v67 = vld [vmem:[#allocation5 + $0x48] sm:$0xff]
    %v68 = vld [vmem:[#allocation5 + $0x50] sm:$0xff]
    %v69 = vld [vmem:[#allocation5 + $0x58] sm:$0xff]
    %v70 = vld [vmem:[#allocation5 + $0x60] sm:$0xff]
    %v71 = vld [vmem:[#allocation5 + $0x68] sm:$0xff]
    %v72 = vld [vmem:[#allocation5 + $0x70] sm:$0xff]
    %v73 = vld [vmem:[#allocation5 + $0x78] sm:$0xff]
    %74 = vmatprep.subr.mxu0 0.0
    %75 = vmatpush1.msra.mxu0 %v58
    %76 = vmatprep.subr.mxu0 0.0
    %77 = vmatpush1.msra.mxu0 %v59
    %78 = vmatprep.subr.mxu0 0.0
    %79 = vmatpush1.msra.mxu0 %v60
    %80 = vmatprep.subr.mxu0 0.0
    %81 = vmatpush1.msra.mxu0 %v61
    %82 = vmatprep.subr.mxu0 0.0
    %83 = vmatpush1.msra.mxu0 %v62
    %84 = vmatprep.subr.mxu0 0.0
    %85 = vmatpush1.msra.mxu0 %v63
    %86 = vmatprep.subr.mxu0 0.0
    %87 = vmatpush1.msra.mxu0 %v64
    %88 = vmatprep.subr.mxu0 0.0
    %89 = vmatpush1.msra.mxu0 %v65
    %90 = vmatprep.subr.mxu0 0.0
    %91 = vmatpush1.msra.mxu0 %v66
    %92 = vmatprep.subr.mxu0 0.0
    %93 = vmatpush1.msra.mxu0 %v67
    %94 = vmatprep.subr.mxu0 0.0
    %95 = vmatpush1.msra.mxu0 %v68
    %96 = vmatprep.subr.mxu0 0.0
    %97 = vmatpush1.msra.mxu0 %v69
    %98 = vmatprep.subr.mxu0 0.0
    %99 = vmatpush1.msra.mxu0 %v70
    %100 = vmatprep.subr.mxu0 0.0
    %101 = vmatpush1.msra.mxu0 %v71
    %102 = vmatprep.subr.mxu0 0.0
    %103 = vmatpush1.msra.mxu0 %v72
    %104 = vmatprep.subr.mxu0 0.0
    %105 = vmatpush1.msra.mxu0 %v73
    %106 = vmatprep.subr.mxu0 0.0
    %107 = vmatpush1.msra.mxu0 0.0
    %108 = vmatprep.subr.mxu0 0.0
    %109 = vmatpush1.msra.mxu0 0.0
    %110 = vmatprep.subr.mxu0 0.0
    %111 = vmatpush1.msra.mxu0 0.0
    %112 = vmatprep.subr.mxu0 0.0
    %113 = vmatpush1.msra.mxu0 0.0
    %114 = vmatprep.subr.mxu0 0.0
    %115 = vmatpush1.msra.mxu0 0.0
    %116 = vmatprep.subr.mxu0 0.0
    %117 = vmatpush1.msra.mxu0 0.0
    %118 = vmatprep.subr.mxu0 0.0
    %119 = vmatpush1.msra.mxu0 0.0
    %120 = vmatprep.subr.mxu0 0.0
    %121 = vmatpush1.msra.mxu0 0.0
    %122 = vmatprep.subr.mxu0 0.0
    %123 = vmatpush1.msra.mxu0 0.0
    %124 = vmatprep.subr.mxu0 0.0
    %125 = vmatpush1.msra.mxu0 0.0
    %126 = vmatprep.subr.mxu0 0.0
    %127 = vmatpush1.msra.mxu0 0.0
    %128 = vmatprep.subr.mxu0 0.0
    %129 = vmatpush1.msra.mxu0 0.0
    %130 = vmatprep.subr.mxu0 0.0
    %131 = vmatpush1.msra.mxu0 0.0
    %132 = vmatprep.subr.mxu0 0.0
    %133 = vmatpush1.msra.mxu0 0.0
    %134 = vmatprep.subr.mxu0 0.0
    %135 = vmatpush1.msra.mxu0 0.0
    %136 = vmatprep.subr.mxu0 0.0
    %137 = vmatpush1.msra.mxu0 0.0
    %138 = vmatprep.mubr.f32.mxu0 0.0
    %139 = vmatmul.mubr.f32.gmra.mrb[0].mxu0 %v56
    %v140 = vpop.f32.mrb[0].mxu0
    %v141 = vadd.f32 0.0, %v140
    %v142 = vpop.f32.mrb[0].mxu0
    %143 = vmatprep.mubr.f32.mxu0 0.0
    %144 = vmatmul.mubr.f32.gmra.mrb[0].mxu0 %v57
    %v145 = vpop.f32.mrb[0].mxu0
    %v146 = vadd.f32 0.0, %v145
    %v147 = vpop.f32.mrb[0].mxu0
    %148 = vdwg.mxu0
    %v149 = vmax.f32 %v141, 0.0
    %v150 = vmax.f32 %v146, 0.0
    %v151 = vld [vmem:[#allocation7] sm:$0xff]
    %v152 = vld [vmem:[#allocation7 + $0x8] sm:$0xff]
    %v153 = vld [vmem:[#allocation7 + $0x10] sm:$0xff]
    %v154 = vld [vmem:[#allocation7 + $0x18] sm:$0xff]
    %v155 = vld [vmem:[#allocation7 + $0x20] sm:$0xff]
    %v156 = vld [vmem:[#allocation7 + $0x28] sm:$0xff]
    %v157 = vld [vmem:[#allocation7 + $0x30] sm:$0xff]
    %v158 = vld [vmem:[#allocation7 + $0x38] sm:$0xff]
    %v159 = vld [vmem:[#allocation7 + $0x40] sm:$0xff]
    %v160 = vld [vmem:[#allocation7 + $0x48] sm:$0xff]
    %v161 = vld [vmem:[#allocation7 + $0x50] sm:$0xff]
    %v162 = vld [vmem:[#allocation7 + $0x58] sm:$0xff]
    %v163 = vld [vmem:[#allocation7 + $0x60] sm:$0xff]
    %v164 = vld [vmem:[#allocation7 + $0x68] sm:$0xff]
    %v165 = vld [vmem:[#allocation7 + $0x70] sm:$0xff]
    %v166 = vld [vmem:[#allocation7 + $0x78] sm:$0xff]
    %167 = vmatprep.subr.mxu0 0.0
    %168 = vmatpush1.msra.mxu0 %v151
    %169 = vmatprep.subr.mxu0 0.0
    %170 = vmatpush1.msra.mxu0 %v152
    %171 = vmatprep.subr.mxu0 0.0
    %172 = vmatpush1.msra.mxu0 %v153
    %173 = vmatprep.subr.mxu0 0.0
    %174 = vmatpush1.msra.mxu0 %v154
    %175 = vmatprep.subr.mxu0 0.0
    %176 = vmatpush1.msra.mxu0 %v155
    %177 = vmatprep.subr.mxu0 0.0
    %178 = vmatpush1.msra.mxu0 %v156
    %179 = vmatprep.subr.mxu0 0.0
    %180 = vmatpush1.msra.mxu0 %v157
    %181 = vmatprep.subr.mxu0 0.0
    %182 = vmatpush1.msra.mxu0 %v158
    %183 = vmatprep.subr.mxu0 0.0
    %184 = vmatpush1.msra.mxu0 %v159
    %185 = vmatprep.subr.mxu0 0.0
    %186 = vmatpush1.msra.mxu0 %v160
    %187 = vmatprep.subr.mxu0 0.0
    %188 = vmatpush1.msra.mxu0 %v161
    %189 = vmatprep.subr.mxu0 0.0
    %190 = vmatpush1.msra.mxu0 %v162
    %191 = vmatprep.subr.mxu0 0.0
    %192 = vmatpush1.msra.mxu0 %v163
    %193 = vmatprep.subr.mxu0 0.0
    %194 = vmatpush1.msra.mxu0 %v164
    %195 = vmatprep.subr.mxu0 0.0
    %196 = vmatpush1.msra.mxu0 %v165
    %197 = vmatprep.subr.mxu0 0.0
    %198 = vmatpush1.msra.mxu0 %v166
    %199 = vmatprep.subr.mxu0 0.0
    %200 = vmatpush1.msra.mxu0 0.0
    %201 = vmatprep.subr.mxu0 0.0
    %202 = vmatpush1.msra.mxu0 0.0
    %203 = vmatprep.subr.mxu0 0.0
    %204 = vmatpush1.msra.mxu0 0.0
    %205 = vmatprep.subr.mxu0 0.0
    %206 = vmatpush1.msra.mxu0 0.0
    %207 = vmatprep.subr.mxu0 0.0
    %208 = vmatpush1.msra.mxu0 0.0
    %209 = vmatprep.subr.mxu0 0.0
    %210 = vmatpush1.msra.mxu0 0.0
    %211 = vmatprep.subr.mxu0 0.0
    %212 = vmatpush1.msra.mxu0 0.0
    %213 = vmatprep.subr.mxu0 0.0
    %214 = vmatpush1.msra.mxu0 0.0
    %215 = vmatprep.subr.mxu0 0.0
    %216 = vmatpush1.msra.mxu0 0.0
    %217 = vmatprep.subr.mxu0 0.0
    %218 = vmatpush1.msra.mxu0 0.0
    %219 = vmatprep.subr.mxu0 0.0
    %220 = vmatpush1.msra.mxu0 0.0
    %221 = vmatprep.subr.mxu0 0.0
    %222 = vmatpush1.msra.mxu0 0.0
    %223 = vmatprep.subr.mxu0 0.0
    %224 = vmatpush1.msra.mxu0 0.0
    %225 = vmatprep.subr.mxu0 0.0
    %226 = vmatpush1.msra.mxu0 0.0
    %227 = vmatprep.subr.mxu0 0.0
    %228 = vmatpush1.msra.mxu0 0.0
    %229 = vmatprep.subr.mxu0 0.0
    %230 = vmatpush1.msra.mxu0 0.0
    %231 = vmatprep.mubr.f32.mxu0 0.0
    %232 = vmatmul.mubr.f32.gmra.mrb[0].mxu0 %v149
    %v233 = vpop.f32.mrb[0].mxu0
    %v234 = vadd.f32 0.0, %v233
    %v235 = vpop.f32.mrb[0].mxu0
    %236 = vmatprep.mubr.f32.mxu0 0.0
    %237 = vmatmul.mubr.f32.gmra.mrb[0].mxu0 %v150
    %v238 = vpop.f32.mrb[0].mxu0
    %v239 = vadd.f32 0.0, %v238
    %v240 = vpop.f32.mrb[0].mxu0
    %241 = vdwg.mxu0
    %v242 = vmax.f32 %v234, 0.0
    %v243 = vmax.f32 %v239, 0.0
    %v244 = vadd.f32 %v56, %v242
    %v245 = vadd.f32 %v57, %v243
    %246 = vst [vmem:[#allocation8] sm:$0xff] %v244
    %247 = vst [vmem:[#allocation8 + $0x8] sm:$0xff] %v245
    // Predicated region
    $region26: #{tpu_custom_call.1} parent=1 // pred_check
      _
    $region27: #{tpu_custom_call.1} parent=1 // pred_check_branch
      %249 = sbr.rel (0) target = $region29
    $region28: #{tpu_custom_call.1} parent=1 // pred_region
      %s251 = ssub.s32 256, 256
      %252 = vsyncadd [#allocation4], %s251
      %s253 = sshll.u32 [#allocation8], 4
      %s254 = int_to_ptr.vmem [resolvable:$true] %s253
      %259 = dma.vmem_to_hbm [thread:$0]  %s254, 256, %s3, [#allocation4], 128, 128, 8
    $region29: #{tpu_custom_call.1} parent=1 // pred_fallthru
      _
    // Predicated region
    $region30: #{tpu_custom_call.1} parent=1 // pred_check
      _
    $region31: #{tpu_custom_call.1} parent=1 // pred_check_branch
      %261 = sbr.rel (0) target = $region33
    $region32: #{tpu_custom_call.1} parent=1 // pred_region
      %262 = dma.done [#allocation4], 256
    $region33: #{tpu_custom_call.1} parent=1 // pred_fallthru
      _
    %263 = vsyncpa [#allocation3], 1
    %264 = vsyncpa [#allocation6], 1
    %265 = vsyncpa [#allocation4], 1

</llo_original>
